<compile_context>
chip_gen: v5e
topology: v5e:2x2
jax: 0.10.0
libtpu: 0.0.40
codegen_flags: <defaults>
</compile_context>

<pallas_src>
import functools

import jax
import jax.numpy as jnp
from jax import lax
from jax.experimental import pallas as pl
from jax.experimental.pallas import tpu as pltpu

LN_EPS = 1e-5  # torch.nn.LayerNorm default


def _round_up(x, m):
    return ((x + m - 1) // m) * m


def pooler_kernel(x_ref, w_ref, b_ref, g_ref, beta_ref, o_ref):
    # x_ref: (TILE_B, D) f32   w_ref: (D, D) bf16   b/g/beta: (1, D) f32
    x = x_ref[...]

    # Linear: x @ W^T + b  (weight pre-transposed + pre-cast to bf16 on host;
    # bf16 MXU operands, f32 accumulation).
    h = jnp.dot(x.astype(jnp.bfloat16), w_ref[...],
                preferred_element_type=jnp.float32)
    h = h + b_ref[...]

    # Dropout(p=0.01): identity in eval mode.

    # LayerNorm over the hidden dim, folded into one scale/shift pass.
    mu = jnp.mean(h, axis=-1, keepdims=True)
    var = jnp.maximum(jnp.mean(h * h, axis=-1, keepdims=True) - mu * mu, 0.0)
    rstd = lax.rsqrt(var + LN_EPS)                 # EUP path
    scale = g_ref[...] * rstd                      # (TILE_B, D)
    shift = beta_ref[...] - mu * scale
    hn = h * scale + shift

    # SiLU: x * sigmoid(x)  (f32 elementwise)
    o_ref[...] = hn * jax.nn.sigmoid(hn)


def pooler_forward(x_t, w_t_bf16, b, gamma, beta, *, tile_b=256):
    """x_t: [B, D] f32; w_t_bf16: [D_in, D_out] bf16 (already transposed);
    b/gamma/beta: [1, D] f32."""
    B, D = x_t.shape
    assert D % 128 == 0, "hidden dim must be a multiple of 128 (lane-dense)"

    # Batch tile: multiple of 8 sublanes, never larger than the padded batch.
    tile_b = max(8, (tile_b // 8) * 8)
    tile_b = min(tile_b, _round_up(B, 8))

    b_pad = _round_up(B, tile_b)
    if b_pad != B:
        x_t = jnp.pad(x_t, ((0, b_pad - B), (0, 0)))

    grid = (b_pad // tile_b,)

    out = pl.pallas_call(
        pooler_kernel,
        out_shape=jax.ShapeDtypeStruct((b_pad, D), jnp.float32),
        grid=grid,
        in_specs=[
            pl.BlockSpec((tile_b, D), lambda i: (i, 0)),   # streamed x tiles
            pl.BlockSpec((D, D), lambda i: (0, 0)),        # VMEM-resident weight
            pl.BlockSpec((1, D), lambda i: (0, 0)),        # bias
            pl.BlockSpec((1, D), lambda i: (0, 0)),        # LN gamma
            pl.BlockSpec((1, D), lambda i: (0, 0)),        # LN beta
        ],
        out_specs=pl.BlockSpec((tile_b, D), lambda i: (i, 0)),
        compiler_params=pltpu.CompilerParams(
            # Batch tiles are independent -> shard across TensorCores on v7x.
            dimension_semantics=("parallel",)),
    )(x_t, w_t_bf16, b, gamma, beta)

    return out[:B] if b_pad != B else out


def contents_encoder_forward(bert_hidden_states, params, *, tile_b=256):
    """bert_hidden_states: [B, S, D] — stands in for self.bert(**title)[0]."""
    # CLS-token slice stays as plain-JAX glue: a size-1 block on the (second-
    # minor) seq axis is not (8,128)-tile aligned for a Pallas BlockSpec.
    x_t = bert_hidden_states[:, 0]
    return pooler_forward(x_t, params["w_t"], params["b"],
                          params["gamma"], params["beta"], tile_b=tile_b)


def xavier_uniform(key, shape):
    fan_out, fan_in = shape  # torch nn.Linear weight is [out_features, in_features]
    bound = (6.0 / (fan_in + fan_out)) ** 0.5
    return jax.random.uniform(key, shape, jnp.float32, minval=-bound, maxval=bound)


def reference_forward(bert_hidden_states, params):
    """Pure-JAX f32 reference (uses the same bf16-quantized weight values)."""
    x_t = bert_hidden_states[:, 0]
    w = params["w_t"].astype(jnp.float32)
    h = x_t @ w + params["b"]
    mu = jnp.mean(h, axis=-1, keepdims=True)
    var = jnp.mean((h - mu) ** 2, axis=-1, keepdims=True)
    hn = (h - mu) / jnp.sqrt(var + LN_EPS)
    hn = hn * params["gamma"] + params["beta"]
    return hn * jax.nn.sigmoid(hn)


if __name__ == "__main__":
    # Small but lane-dense shapes: batch=20, title seq len=8, hidden=128.
    B, S, D = 20, 8, 128

    key = jax.random.PRNGKey(0)
    k_hidden, k_w = jax.random.split(key)

    # Simulated BERT last_hidden_state: [B, S, D]
    bert_hidden_states = jax.random.normal(k_hidden, (B, S, D), jnp.float32)

    # Pooler params (matching init_weights):
    #   Linear: xavier_uniform weight [D, D] (torch [out, in]), zero bias
    #   LayerNorm: weight=1, bias=0
    w = xavier_uniform(k_w, (D, D))
    params = {
        "w_t": jnp.transpose(w).astype(jnp.bfloat16),  # [in, out], bf16 for MXU
        "b": jnp.zeros((1, D), jnp.float32),
        "gamma": jnp.ones((1, D), jnp.float32),
        "beta": jnp.zeros((1, D), jnp.float32),
    }

    # tile_b=8 keeps the demo small while still exercising a multi-step,
    # pipelined grid (and the batch-padding path: 20 -> 24 rows).
    out = contents_encoder_forward(bert_hidden_states, params, tile_b=8)
    out = jax.block_until_ready(out)

    ref = reference_forward(bert_hidden_states, params)
    assert out.shape == (B, D)
    # bf16 MXU inputs with f32 accumulation vs f32 reference matmul.
    assert jnp.allclose(out, ref, atol=2e-2, rtol=2e-2), "mismatch vs reference"

    print("KERNEL_OK")
</pallas_src>

<mosaic_0001>
module attributes {stable_mosaic.version = 11 : i64} {
  func.func @pooler_kernel(%arg0: i32, %arg1: memref<8x128xf32, #tpu.memory_space<vmem>>, %arg2: memref<128x128xbf16, #tpu.memory_space<vmem>>, %arg3: memref<1x128xf32, #tpu.memory_space<vmem>>, %arg4: memref<1x128xf32, #tpu.memory_space<vmem>>, %arg5: memref<1x128xf32, #tpu.memory_space<vmem>>, %arg6: memref<8x128xf32, #tpu.memory_space<vmem>>) attributes {dimension_semantics = [#tpu.dimension_semantics<parallel>], iteration_bounds = array<i64: 3>, scalar_prefetch = 0 : i64, scratch_operands = 0 : i64, tpu.core_type = #tpu.core_type<tc>, window_params = [{transform_indices = @transform_0, window_bounds = array<i64: 8, 128>}, {pipeline_mode = #tpu.pipeline_mode<synchronous>, transform_indices = @transform_1, window_bounds = array<i64: 128, 128>}, {pipeline_mode = #tpu.pipeline_mode<synchronous>, transform_indices = @transform_2, window_bounds = array<i64: 1, 128>}, {pipeline_mode = #tpu.pipeline_mode<synchronous>, transform_indices = @transform_3, window_bounds = array<i64: 1, 128>}, {pipeline_mode = #tpu.pipeline_mode<synchronous>, transform_indices = @transform_4, window_bounds = array<i64: 1, 128>}, {transform_indices = @transform_5, window_bounds = array<i64: 8, 128>}]} {
    %c0 = arith.constant 0 : index
    %c0_0 = arith.constant 0 : index
    %0 = vector.load %arg1[%c0, %c0_0] : memref<8x128xf32, #tpu.memory_space<vmem>>, vector<8x128xf32>
    %1 = arith.truncf %0 : vector<8x128xf32> to vector<8x128xbf16>
    %c0_1 = arith.constant 0 : index
    %c0_2 = arith.constant 0 : index
    %2 = vector.load %arg2[%c0_1, %c0_2] : memref<128x128xbf16, #tpu.memory_space<vmem>>, vector<128x128xbf16>
    %cst = arith.constant dense<0.000000e+00> : vector<8x128xf32>
    %3 = tpu.matmul %1, %2, %cst {dimension_numbers = #tpu.dot_dimension_numbers<[1], [0], [0], [1], [0, 0, 1, 1], [], []>} : vector<8x128xbf16>, vector<128x128xbf16>, vector<8x128xf32> -> vector<8x128xf32>
    %c0_3 = arith.constant 0 : index
    %c0_4 = arith.constant 0 : index
    %4 = vector.load %arg3[%c0_3, %c0_4] : memref<1x128xf32, #tpu.memory_space<vmem>>, vector<1x128xf32>
    %5 = vector.broadcast %4 : vector<1x128xf32> to vector<8x128xf32>
    %6 = arith.addf %3, %5 : vector<8x128xf32>
    %cst_5 = arith.constant dense<0.000000e+00> : vector<8xf32>
    %7 = vector.multi_reduction <add>, %6, %cst_5 [1] : vector<8x128xf32> to vector<8xf32>
    %8 = vector.shape_cast %7 : vector<8xf32> to vector<8x1xf32>
    %cst_6 = arith.constant 1.280000e+02 : f32
    %9 = vector.broadcast %cst_6 : f32 to vector<8x1xf32>
    %10 = arith.divf %8, %9 : vector<8x1xf32>
    %11 = arith.mulf %6, %6 : vector<8x128xf32>
    %cst_7 = arith.constant dense<0.000000e+00> : vector<8xf32>
    %12 = vector.multi_reduction <add>, %11, %cst_7 [1] : vector<8x128xf32> to vector<8xf32>
    %13 = vector.shape_cast %12 : vector<8xf32> to vector<8x1xf32>
    %cst_8 = arith.constant 1.280000e+02 : f32
    %14 = vector.broadcast %cst_8 : f32 to vector<8x1xf32>
    %15 = arith.divf %13, %14 : vector<8x1xf32>
    %16 = arith.mulf %10, %10 : vector<8x1xf32>
    %17 = arith.subf %15, %16 : vector<8x1xf32>
    %cst_9 = arith.constant 0.000000e+00 : f32
    %18 = vector.broadcast %cst_9 : f32 to vector<8x1xf32>
    %19 = arith.maximumf %17, %18 : vector<8x1xf32>
    %cst_10 = arith.constant 9.99999974E-6 : f32
    %20 = vector.broadcast %cst_10 : f32 to vector<8x1xf32>
    %21 = arith.addf %19, %20 : vector<8x1xf32>
    %22 = math.rsqrt %21 : vector<8x1xf32>
    %c0_11 = arith.constant 0 : index
    %c0_12 = arith.constant 0 : index
    %23 = vector.load %arg4[%c0_11, %c0_12] : memref<1x128xf32, #tpu.memory_space<vmem>>, vector<1x128xf32>
    %24 = vector.broadcast %23 : vector<1x128xf32> to vector<8x128xf32>
    %25 = vector.broadcast %22 : vector<8x1xf32> to vector<8x128xf32>
    %26 = arith.mulf %24, %25 : vector<8x128xf32>
    %c0_13 = arith.constant 0 : index
    %c0_14 = arith.constant 0 : index
    %27 = vector.load %arg5[%c0_13, %c0_14] : memref<1x128xf32, #tpu.memory_space<vmem>>, vector<1x128xf32>
    %28 = vector.broadcast %10 : vector<8x1xf32> to vector<8x128xf32>
    %29 = arith.mulf %28, %26 : vector<8x128xf32>
    %30 = vector.broadcast %27 : vector<1x128xf32> to vector<8x128xf32>
    %31 = arith.subf %30, %29 : vector<8x128xf32>
    %32 = arith.mulf %6, %26 : vector<8x128xf32>
    %33 = arith.addf %32, %31 : vector<8x128xf32>
    %34 = arith.negf %33 : vector<8x128xf32>
    %35 = math.exp %34 : vector<8x128xf32>
    %cst_15 = arith.constant 1.000000e+00 : f32
    %36 = vector.broadcast %cst_15 : f32 to vector<8x128xf32>
    %37 = arith.addf %36, %35 : vector<8x128xf32>
    %38 = arith.divf %36, %37 : vector<8x128xf32>
    %39 = arith.mulf %33, %38 : vector<8x128xf32>
    %c0_16 = arith.constant 0 : index
    %c0_17 = arith.constant 0 : index
    %40 = vector.load %arg6[%c0_16, %c0_17] : memref<8x128xf32, #tpu.memory_space<vmem>>, vector<8x128xf32>
    tpu.vector_store %arg6[%c0_16, %c0_17], %39 {strides = array<i32>} : memref<8x128xf32, #tpu.memory_space<vmem>>, vector<8x128xf32>,
    return
  }
  func.func @transform_0(%arg0: i32) -> (i32, i32) {
    %c0_i32 = arith.constant 0 : i32
    %c0_i32_0 = arith.constant 0 : i32
    return %arg0, %c0_i32 : i32, i32
  }
  func.func @transform_1(%arg0: i32) -> (i32, i32) {
    %c0_i32 = arith.constant 0 : i32
    %c0_i32_0 = arith.constant 0 : i32
    %c0_i32_1 = arith.constant 0 : i32
    return %c0_i32, %c0_i32_0 : i32, i32
  }
  func.func @transform_2(%arg0: i32) -> (i32, i32) {
    %c0_i32 = arith.constant 0 : i32
    %c0_i32_0 = arith.constant 0 : i32
    %c0_i32_1 = arith.constant 0 : i32
    return %c0_i32, %c0_i32_0 : i32, i32
  }
  func.func @transform_3(%arg0: i32) -> (i32, i32) {
    %c0_i32 = arith.constant 0 : i32
    %c0_i32_0 = arith.constant 0 : i32
    %c0_i32_1 = arith.constant 0 : i32
    return %c0_i32, %c0_i32_0 : i32, i32
  }
  func.func @transform_4(%arg0: i32) -> (i32, i32) {
    %c0_i32 = arith.constant 0 : i32
    %c0_i32_0 = arith.constant 0 : i32
    %c0_i32_1 = arith.constant 0 : i32
    return %c0_i32, %c0_i32_0 : i32, i32
  }
  func.func @transform_5(%arg0: i32) -> (i32, i32) {
    %c0_i32 = arith.constant 0 : i32
    %c0_i32_0 = arith.constant 0 : i32
    return %arg0, %c0_i32 : i32, i32
  }
}

</mosaic_0001>

<llo_original>
// kernel: tpu_custom_call.1
$region0: #{tpu_custom_call.1}
  #allocation0 [shape = 'u32[]', space=smem, size = 0x4, offset = 0x4, fixed_abs, tag = 'smem constant byte address 0x4 - core index']
  #allocation1 [shape = 'u32[72,128]{1,0:T(1,128)}', space=vmem, size = 0x9000, scoped, tag = 'internal scratch']
  %s0 = inlined_call_operand.hbm [shape: f32[24,128], index: 0, kind: input, shape index: {}]
  %s1 = inlined_call_operand.hbm [shape: bf16[128,128], index: 1, kind: input, shape index: {}]
  %s2 = inlined_call_operand.vmem [shape: f32[1,128], index: 2, kind: input, shape index: {}]
  %s3 = inlined_call_operand.vmem [shape: f32[1,128], index: 3, kind: input, shape index: {}]
  %s4 = inlined_call_operand.vmem [shape: f32[1,128], index: 4, kind: input, shape index: {}]
  %s5 = inlined_call_operand.hbm [shape: f32[24,128], index: 5, kind: output, shape index: {}]
  %s6 = sld [smem:[#allocation0]]
  $region61: #{tpu_custom_call.1} parent=0
    _
  %s8 = ssub.s32 1, %s6
  %s9 = scalar_select 0, %s8, %s6
  $region1: #{tpu_custom_call.1} parent=0
    #allocation2 [shape = 'u8[8192]{0}', space=vmem, size = 0x2000, scoped, tag = 'input window, operand 0']
    #allocation3 [shape = 's32[2]{0}', space=sflag, size = 0x8, scoped, tag = 'scoped memory for tpu_custom_call.1']
    #allocation4 [shape = 's32[2]{0}', space=sflag, size = 0x8, scoped, tag = 'scoped memory for tpu_custom_call.1']
    #allocation5 [shape = 'u8[32768]{0}', space=vmem, size = 0x8000, scoped, tag = 'input window, operand 1, single buffered']
    #allocation6 [shape = 's32[1]{0}', space=sflag, size = 0x4, scoped, tag = 'scoped memory for tpu_custom_call.1']
    #allocation7 [shape = 'u8[8192]{0}', space=vmem, size = 0x2000, scoped, tag = 'output window, operand 0']
    %10 = vsyncpa [#allocation3], 0
    %s11 = scalar_lea.sflag [#allocation3], 1
    %12 = vsyncpa %s11, 0
    %13 = vsyncpa [#allocation6], 0
    %14 = vsyncpa [#allocation4], 0
    %s15 = scalar_lea.sflag [#allocation4], 1
    %16 = vsyncpa %s15, 0
    loop: start=0, step=1, limit=5
    $region2: #{tpu_custom_call.1} parent=1 // loop_pre_header
      _
    $region3: #{tpu_custom_call.1} parent=1 // loop_header
      %s18 = sphi 0, %s22
      %p19 = scmp.ge.s32.totalorder %s18, 5
      %s28 = sphi 0, %s30
      %s31 = sphi 0, %s28
      %s32 = sphi 0, %s31
      %s48 = sphi 0, %s32
      %s52 = sphi 0, %s52
      %s54 = sphi 0, %s52
      %s55 = sphi 0, %s54
      %s69 = sphi 0, %s55
      %s73 = sphi 0, %s73
      %s75 = sphi 0, %s73
      %s76 = sphi 0, %s75
      %s90 = sphi 0, %s76
      %s94 = sphi 0, %s94
      %s96 = sphi 0, %s94
      %s97 = sphi 0, %s96
      %s111 = sphi 0, %s97
      %s115 = sphi 0, %s115
      %s117 = sphi 0, %s115
      %s118 = sphi 0, %s117
      %s132 = sphi 0, %s118
      %s138 = sphi 0, %s140
      %s141 = sphi 0, %s138
      %s142 = sphi 0, %s141
      %s158 = sphi 0, %s142
    $region4: #{tpu_custom_call.1} parent=1 // loop_header_branch
      %21 = sbr.rel (%p19) target = $region8
    $region5: #{tpu_custom_call.1} parent=1 // loop_body
      %s23 = ssub.s32 %s18, 1
      %s24 = ssub.s32 %s18, 2
      %s25 = sadd.s32 %s18, 1
      %s26 = ssub.s32 %s18, %s25
      %p27 = scmp.eq.s32.totalorder %s26, 0
      %s29 = sadd.s32 %s28, 1
      %s30 = scalar_select %p27, %s28, %s29
      %p33 = pneg %p27
      %p34 = scmp.eq.s32.totalorder %s18, 2
      %p35 = por %p33, %p34
      %p36 = scmp.ne.s32.totalorder %s28, %s31
      %p37 = scmp.eq.s32.totalorder %s18, 0
      %p38 = por %p36, %p37
      %p39 = scmp.ne.s32.totalorder %s28, %s31
      %p40 = scmp.eq.s32.totalorder %s23, 2
      %p41 = por %p39, %p40
      %p42 = scmp.ne.s32.totalorder %s31, %s32
      %p43 = scmp.eq.s32.totalorder %s23, 0
      %p44 = por %p42, %p43
      %p45 = scmp.ne.s32.totalorder %s31, %s32
      %p46 = scmp.eq.s32.totalorder %s24, 2
      %p47 = por %p45, %p46
      %p49 = scmp.ne.s32.totalorder %s32, %s48
      %p50 = scmp.eq.s32.totalorder %s24, 0
      %p51 = por %p49, %p50
      %s53 = sadd.s32 %s52, 1
      %p56 = scmp.eq.s32.totalorder %s18, 2
      %p57 = scmp.ne.s32.totalorder %s52, %s54
      %p58 = scmp.eq.s32.totalorder %s18, 0
      %p59 = por %p57, %p58
      %p60 = scmp.ne.s32.totalorder %s52, %s54
      %p61 = scmp.eq.s32.totalorder %s23, 2
      %p62 = por %p60, %p61
      %p63 = scmp.ne.s32.totalorder %s54, %s55
      %p64 = scmp.eq.s32.totalorder %s23, 0
      %p65 = por %p63, %p64
      %p66 = scmp.ne.s32.totalorder %s54, %s55
      %p67 = scmp.eq.s32.totalorder %s24, 2
      %p68 = por %p66, %p67
      %p70 = scmp.ne.s32.totalorder %s55, %s69
      %p71 = scmp.eq.s32.totalorder %s24, 0
      %p72 = por %p70, %p71
      %s74 = sadd.s32 %s73, 1
      %p77 = scmp.eq.s32.totalorder %s18, 2
      %p78 = scmp.ne.s32.totalorder %s73, %s75
      %p79 = scmp.eq.s32.totalorder %s18, 0
      %p80 = por %p78, %p79
      %p81 = scmp.ne.s32.totalorder %s73, %s75
      %p82 = scmp.eq.s32.totalorder %s23, 2
      %p83 = por %p81, %p82
      %p84 = scmp.ne.s32.totalorder %s75, %s76
      %p85 = scmp.eq.s32.totalorder %s23, 0
      %p86 = por %p84, %p85
      %p87 = scmp.ne.s32.totalorder %s75, %s76
      %p88 = scmp.eq.s32.totalorder %s24, 2
      %p89 = por %p87, %p88
      %p91 = scmp.ne.s32.totalorder %s76, %s90
      %p92 = scmp.eq.s32.totalorder %s24, 0
      %p93 = por %p91, %p92
      %s95 = sadd.s32 %s94, 1
      %p98 = scmp.eq.s32.totalorder %s18, 2
      %p99 = scmp.ne.s32.totalorder %s94, %s96
      %p100 = scmp.eq.s32.totalorder %s18, 0
      %p101 = por %p99, %p100
      %p102 = scmp.ne.s32.totalorder %s94, %s96
      %p103 = scmp.eq.s32.totalorder %s23, 2
      %p104 = por %p102, %p103
      %p105 = scmp.ne.s32.totalorder %s96, %s97
      %p106 = scmp.eq.s32.totalorder %s23, 0
      %p107 = por %p105, %p106
      %p108 = scmp.ne.s32.totalorder %s96, %s97
      %p109 = scmp.eq.s32.totalorder %s24, 2
      %p110 = por %p108, %p109
      %p112 = scmp.ne.s32.totalorder %s97, %s111
      %p113 = scmp.eq.s32.totalorder %s24, 0
      %p114 = por %p112, %p113
      %s116 = sadd.s32 %s115, 1
      %p119 = scmp.eq.s32.totalorder %s18, 2
      %p120 = scmp.ne.s32.totalorder %s115, %s117
      %p121 = scmp.eq.s32.totalorder %s18, 0
      %p122 = por %p120, %p121
      %p123 = scmp.ne.s32.totalorder %s115, %s117
      %p124 = scmp.eq.s32.totalorder %s23, 2
      %p125 = por %p123, %p124
      %p126 = scmp.ne.s32.totalorder %s117, %s118
      %p127 = scmp.eq.s32.totalorder %s23, 0
      %p128 = por %p126, %p127
      %p129 = scmp.ne.s32.totalorder %s117, %s118
      %p130 = scmp.eq.s32.totalorder %s24, 2
      %p131 = por %p129, %p130
      %p133 = scmp.ne.s32.totalorder %s118, %s132
      %p134 = scmp.eq.s32.totalorder %s24, 0
      %p135 = por %p133, %p134
      %s136 = ssub.s32 %s18, %s25
      %p137 = scmp.eq.s32.totalorder %s136, 0
      %s139 = sadd.s32 %s138, 1
      %s140 = scalar_select %p137, %s138, %s139
      %p143 = pneg %p137
      %p144 = scmp.eq.s32.totalorder %s18, 2
      %p145 = por %p143, %p144
      %p146 = scmp.ne.s32.totalorder %s138, %s141
      %p147 = scmp.eq.s32.totalorder %s18, 0
      %p148 = por %p146, %p147
      %p149 = scmp.ne.s32.totalorder %s138, %s141
      %p150 = scmp.eq.s32.totalorder %s23, 2
      %p151 = por %p149, %p150
      %p152 = scmp.ne.s32.totalorder %s141, %s142
      %p153 = scmp.eq.s32.totalorder %s23, 0
      %p154 = por %p152, %p153
      %p155 = scmp.ne.s32.totalorder %s141, %s142
      %p156 = scmp.eq.s32.totalorder %s24, 2
      %p157 = por %p155, %p156
      %p159 = scmp.ne.s32.totalorder %s142, %s158
      %p160 = scmp.eq.s32.totalorder %s24, 0
      %p161 = por %p159, %p160
      %p162 = scmp.le.s32.totalorder 1, %s18
      %p163 = scmp.lt.s32.totalorder %s18, 4
      %p164 = pnand %p162, %p163
      %p165 = pneg %p164
      // Predicated region
      $region9: #{tpu_custom_call.1} parent=5 // pred_check
        _
      $region10: #{tpu_custom_call.1} parent=5 // pred_check_branch
        %167 = sbr.rel (%p164) target = $region12
      $region11: #{tpu_custom_call.1} parent=5 // pred_region
        %s168 = ssub.s32 %s18, 1
        // Predicated region
        $region13: #{tpu_custom_call.1} parent=11 // pred_check
          %p169 = pneg %p65
        $region14: #{tpu_custom_call.1} parent=11 // pred_check_branch
          %171 = sbr.rel (%p169) target = $region16
        $region15: #{tpu_custom_call.1} parent=11 // pred_region
          %173 = vsyncadd [#allocation6], 0
          %s174 = sshll.u32 %s1, 4
          %s175 = int_to_ptr.hbm [resolvable:$true] %s174
          %s176 = sshll.u32 [#allocation5], 4
          %s177 = int_to_ptr.vmem [resolvable:$true] %s176
          %182 = dma.hbm_to_vmem [thread:$0]  %s175, 1024, %s177, [#allocation6], 64, 64, 4
        $region16: #{tpu_custom_call.1} parent=11 // pred_fallthru
          _
        // Predicated region
        $region17: #{tpu_custom_call.1} parent=11 // pred_check
          %p183 = pneg %p86
        $region18: #{tpu_custom_call.1} parent=11 // pred_check_branch
          %185 = sbr.rel (%p183) target = $region20
        $region19: #{tpu_custom_call.1} parent=11 // pred_region
          _
        $region20: #{tpu_custom_call.1} parent=11 // pred_fallthru
          _
        // Predicated region
        $region21: #{tpu_custom_call.1} parent=11 // pred_check
          %p186 = pneg %p107
        $region22: #{tpu_custom_call.1} parent=11 // pred_check_branch
          %188 = sbr.rel (%p186) target = $region24
        $region23: #{tpu_custom_call.1} parent=11 // pred_region
          _
        $region24: #{tpu_custom_call.1} parent=11 // pred_fallthru
          _
        // Predicated region
        $region25: #{tpu_custom_call.1} parent=11 // pred_check
          %p189 = pneg %p128
        $region26: #{tpu_custom_call.1} parent=11 // pred_check_branch
          %191 = sbr.rel (%p189) target = $region28
        $region27: #{tpu_custom_call.1} parent=11 // pred_region
          _
        $region28: #{tpu_custom_call.1} parent=11 // pred_fallthru
          _
      $region12: #{tpu_custom_call.1} parent=5 // pred_fallthru
        _
      %p192 = scmp.lt.s32.totalorder %s18, 3
      // Predicated region
      $region29: #{tpu_custom_call.1} parent=5 // pred_check
        %p193 = pneg %p192
      $region30: #{tpu_custom_call.1} parent=5 // pred_check_branch
        %195 = sbr.rel (%p193) target = $region32
      $region31: #{tpu_custom_call.1} parent=5 // pred_region
        // Predicated region
        $region33: #{tpu_custom_call.1} parent=31 // pred_check
          %p196 = pneg %p38
        $region34: #{tpu_custom_call.1} parent=31 // pred_check_branch
          %198 = sbr.rel (%p196) target = $region36
        $region35: #{tpu_custom_call.1} parent=31 // pred_region
          %s199 = sand.u32 %s28, 1
          %s200 = scalar_lea.sflag [#allocation3], %s199
          %s201 = sand.u32 %s28, 1
          %s202 = smul.addr %s201, 8
          %s203 = scalar_lea.vmem [#allocation2], %s202
          %205 = vsyncadd %s200, 0
          %s206 = smul.addr %s18, 8
          %s207 = scalar_lea.hbm %s0, %s206
          %s209 = sshll.u32 %s207, 4
          %s210 = int_to_ptr.hbm [resolvable:$true] %s209
          %s211 = sshll.u32 %s203, 4
          %s212 = int_to_ptr.vmem [resolvable:$true] %s211
          %214 = dma.hbm_to_vmem [thread:$0]  %s210, 128, %s212, %s200
        $region36: #{tpu_custom_call.1} parent=31 // pred_fallthru
          _
      $region32: #{tpu_custom_call.1} parent=5 // pred_fallthru
        _
      %p215 = scmp.le.s32.totalorder 1, %s18
      %p216 = scmp.lt.s32.totalorder %s18, 4
      %p217 = pnand %p215, %p216
      %p218 = pneg %p217
      // Predicated region
      $region37: #{tpu_custom_call.1} parent=5 // pred_check
        _
      $region38: #{tpu_custom_call.1} parent=5 // pred_check_branch
        %220 = sbr.rel (%p217) target = $region40
      $region39: #{tpu_custom_call.1} parent=5 // pred_region
        %s221 = ssub.s32 %s18, 1
        %s222 = sand.u32 %s31, 1
        %s223 = scalar_lea.sflag [#allocation3], %s222
        %s224 = sand.u32 %s31, 1
        %s225 = smul.addr %s224, 8
        %s226 = scalar_lea.vmem [#allocation2], %s225
        // Predicated region
        $region41: #{tpu_custom_call.1} parent=39 // pred_check
          %p227 = pneg %p44
        $region42: #{tpu_custom_call.1} parent=39 // pred_check_branch
          %229 = sbr.rel (%p227) target = $region44
        $region43: #{tpu_custom_call.1} parent=39 // pred_region
          %231 = dma.done %s223, 128
        $region44: #{tpu_custom_call.1} parent=39 // pred_fallthru
          _
        // Predicated region
        $region45: #{tpu_custom_call.1} parent=39 // pred_check
          %p232 = pneg %p65
        $region46: #{tpu_custom_call.1} parent=39 // pred_check_branch
          %234 = sbr.rel (%p232) target = $region48
        $region47: #{tpu_custom_call.1} parent=39 // pred_region
          %236 = dma.done [#allocation6], 1024
        $region48: #{tpu_custom_call.1} parent=39 // pred_fallthru
          _
        %s237 = sand.u32 %s31, 1
        %s238 = scalar_lea.sflag [#allocation3], %s237
        %s239 = sand.u32 %s31, 1
        %s240 = smul.addr %s239, 8
        %s241 = scalar_lea.vmem [#allocation2], %s240
        %p242 = pneg %p44
        %p243 = pneg %p41
        %p244 = pneg %p65
        %p245 = pneg %p62
        %p246 = pneg %p86
        %p247 = pneg %p83
        %p248 = pneg %p107
        %p249 = pneg %p104
        %p250 = pneg %p128
        %p251 = pneg %p125
        %p252 = pneg %p154
        %p253 = pneg %p151
        %s254 = sand.u32 %s141, 1
        %s255 = scalar_lea.sflag [#allocation4], %s254
        %s256 = sand.u32 %s141, 1
        %s257 = smul.addr %s256, 8
        %s258 = scalar_lea.vmem [#allocation7], %s257
        %v259 = vld [vmem:[%s226] sm:$0xff]
        %v260 = vpack.c.bf16 %v259, %v259
        %v261 = vld [vmem:[#allocation5] sm:$0xf]
        %v262 = vld [vmem:[#allocation5 + $0x4] sm:$0xf]
        %v263 = vld [vmem:[#allocation5 + $0x8] sm:$0xf]
        %v264 = vld [vmem:[#allocation5 + $0xc] sm:$0xf]
        %v265 = vld [vmem:[#allocation5 + $0x10] sm:$0xf]
        %v266 = vld [vmem:[#allocation5 + $0x14] sm:$0xf]
        %v267 = vld [vmem:[#allocation5 + $0x18] sm:$0xf]
        %v268 = vld [vmem:[#allocation5 + $0x1c] sm:$0xf]
        %v269 = vld [vmem:[#allocation5 + $0x20] sm:$0xf]
        %v270 = vld [vmem:[#allocation5 + $0x24] sm:$0xf]
        %v271 = vld [vmem:[#allocation5 + $0x28] sm:$0xf]
        %v272 = vld [vmem:[#allocation5 + $0x2c] sm:$0xf]
        %v273 = vld [vmem:[#allocation5 + $0x30] sm:$0xf]
        %v274 = vld [vmem:[#allocation5 + $0x34] sm:$0xf]
        %v275 = vld [vmem:[#allocation5 + $0x38] sm:$0xf]
        %v276 = vld [vmem:[#allocation5 + $0x3c] sm:$0xf]
        %v277 = vld [vmem:[%s2] sm:$0x1]
        %v279 = vperm.slane %v277, 0
        %v297 = vunpack.c.l.b16 %v261
        %v298 = vunpack.c.l.b16 %v262
        %v299 = vunpack.c.l.b16 %v263
        %v300 = vunpack.c.l.b16 %v264
        %v301 = vunpack.c.l.b16 %v265
        %v302 = vunpack.c.l.b16 %v266
        %v303 = vunpack.c.l.b16 %v267
        %v304 = vunpack.c.l.b16 %v268
        %v305 = vunpack.c.l.b16 %v269
        %v306 = vunpack.c.l.b16 %v270
        %v307 = vunpack.c.l.b16 %v271
        %v308 = vunpack.c.l.b16 %v272
        %v309 = vunpack.c.l.b16 %v273
        %v310 = vunpack.c.l.b16 %v274
        %v311 = vunpack.c.l.b16 %v275
        %v312 = vunpack.c.l.b16 %v276
        %v313 = vpack.c.b16 %v298, %v297
        %v314 = vpack.c.b16 %v300, %v299
        %v315 = vpack.c.b16 %v302, %v301
        %v316 = vpack.c.b16 %v304, %v303
        %v317 = vpack.c.b16 %v306, %v305
        %v318 = vpack.c.b16 %v308, %v307
        %v319 = vpack.c.b16 %v310, %v309
        %v320 = vpack.c.b16 %v312, %v311
        %329 = vmatpush.bf16.msra.mxu0 %v320
        %330 = vmatpush.bf16.msra.mxu0 %v319
        %331 = vmatpush.bf16.msra.mxu0 %v318
        %332 = vmatpush.bf16.msra.mxu0 %v317
        %333 = vmatpush.bf16.msra.mxu0 %v316
        %334 = vmatpush.bf16.msra.mxu0 %v315
        %335 = vmatpush.bf16.msra.mxu0 %v314
        %336 = vmatpush.bf16.msra.mxu0 %v313
        %337 = vmatmul.bf16.gmra.mxu0 %v260
        %v338 = vpop.f32.mrf.mxu0
        %v339 = vadd.f32 %v279, %v338
        %v340 = vpop.f32.mrf.mxu0
        %341 = vdwg.mxu0
        %342 = vadd.xlane.f32.xlu0 %v339
        %v343 = vpop.xlane.xlu0 %342
        %v344 = vrcp.pop 128.0
        %v345 = vmul.f32 128.0, %v344
        %v346 = vsub.f32 1.0, %v345
        %v347 = vmul.f32 %v344, %v346
        %v348 = vadd.f32 %v344, %v347
        %vm349 = vweird.f32 %v344
        %v350 = vsel %vm349, %v344, %v348
        %v351 = vmul.f32 %v343, %v350
        %v352 = vmul.f32 %v339, %v339
        %353 = vadd.xlane.f32.xlu0 %v352
        %v354 = vpop.xlane.xlu0 %353
        %v355 = vmul.f32 %v354, %v350
        %v356 = vmul.f32 %v351, %v351
        %v357 = vsub.f32 %v355, %v356
        %v358 = vmax.f32 %v357, 0.0
        %v359 = vadd.f32 %v358, 1e-05
        %v360 = vrsqrt.pop %v359
        %v361 = vmul.f32 %v360, %v359
        %v362 = vmul.f32 %v361, %v360
        %v363 = vmul.f32 0.5, %v362
        %v364 = vsub.f32 1.5, %v363
        %v365 = vmul.f32 %v360, %v364
        %vm366 = vweird.f32 %v359
        %vm367 = vweird.f32 %v360
        %vm368 = vmor %vm366, %vm367
        %v369 = vsel %vm368, %v360, %v365
        %v370 = vld [vmem:[%s3] sm:$0x1]
        %v372 = vperm.slane %v370, 0
        %v374 = vmul.f32 %v372, %v369
        %v375 = vld [vmem:[%s4] sm:$0x1]
        %v376 = vmul.f32 %v351, %v374
        %v378 = vperm.slane %v375, 0
        %v380 = vsub.f32 %v378, %v376
        %v381 = vmul.f32 %v339, %v374
        %v382 = vadd.f32 %v381, %v380
        %v383 = vxor.u32 %v382, 2147483648
        %v384 = vmul.f32 %v383, 1.442695
        %v385 = vpow.pop %v384
        %v386 = vadd.f32 %v385, 1.0
        %v387 = vrcp.pop %v386
        %v388 = vmul.f32 %v386, %v387
        %v389 = vsub.f32 1.0, %v388
        %v390 = vmul.f32 %v387, %v389
        %v391 = vadd.f32 %v387, %v390
        %vm392 = vweird.f32 %v386
        %vm393 = vweird.f32 %v387
        %vm394 = vmor %vm392, %vm393
        %v395 = vsel %vm394, %v387, %v391
        %v396 = vand.u32 2147483647, %v386
        %vm397 = vcmp.eq.f32.partialorder %v396, 8.507059e+37
        %v398 = vand.u32 %v386, 2147483648
        %v399 = vor.u32 1.1754944e-38, %v398
        %v400 = vsel %vm397, %v399, %v395
        %v401 = vmul.f32 1.0, %v400
        %v402 = vmul.f32 %v382, %v401
        %403 = vst [vmem:[%s258] sm:$0xff] %v402
        %s404 = sand.u32 %s141, 1
        %s405 = scalar_lea.sflag [#allocation4], %s404
        %s406 = sand.u32 %s141, 1
        %s407 = smul.addr %s406, 8
        %s408 = scalar_lea.vmem [#allocation7], %s407
        // Predicated region
        $region49: #{tpu_custom_call.1} parent=39 // pred_check
          %p409 = pneg %p151
        $region50: #{tpu_custom_call.1} parent=39 // pred_check_branch
          %411 = sbr.rel (%p409) target = $region52
        $region51: #{tpu_custom_call.1} parent=39 // pred_region
          %413 = vsyncadd %s405, 0
          %s414 = smul.addr %s23, 8
          %s415 = scalar_lea.hbm %s5, %s414
          %s417 = sshll.u32 %s408, 4
          %s418 = int_to_ptr.vmem [resolvable:$true] %s417
          %s419 = sshll.u32 %s415, 4
          %s420 = int_to_ptr.hbm [resolvable:$true] %s419
          %422 = dma.vmem_to_hbm [thread:$0]  %s418, 128, %s420, %s405
        $region52: #{tpu_custom_call.1} parent=39 // pred_fallthru
          _
      $region40: #{tpu_custom_call.1} parent=5 // pred_fallthru
        _
      %p423 = scmp.le.s32.totalorder 2, %s18
      // Predicated region
      $region53: #{tpu_custom_call.1} parent=5 // pred_check
        %p424 = pneg %p423
      $region54: #{tpu_custom_call.1} parent=5 // pred_check_branch
        %426 = sbr.rel (%p424) target = $region56
      $region55: #{tpu_custom_call.1} parent=5 // pred_region
        %s427 = ssub.s32 %s18, 2
        // Predicated region
        $region57: #{tpu_custom_call.1} parent=55 // pred_check
          %p428 = pneg %p157
        $region58: #{tpu_custom_call.1} parent=55 // pred_check_branch
          %430 = sbr.rel (%p428) target = $region60
        $region59: #{tpu_custom_call.1} parent=55 // pred_region
          %s431 = sand.u32 %s142, 1
          %s432 = scalar_lea.sflag [#allocation4], %s431
          %s433 = sand.u32 %s142, 1
          %s434 = smul.addr %s433, 8
          %s435 = scalar_lea.vmem [#allocation7], %s434
          %437 = dma.done %s432, 128
        $region60: #{tpu_custom_call.1} parent=55 // pred_fallthru
          _
      $region56: #{tpu_custom_call.1} parent=5 // pred_fallthru
        _
    $region6: #{tpu_custom_call.1} parent=1 // loop_footer
      %s22 = sadd.s32 1, %s18
    $region7: #{tpu_custom_call.1} parent=1 // loop_footer_branch
      %17 = sbr.rel target = $region3
    $region8: #{tpu_custom_call.1} parent=1 // loop_exit
      _
    %438 = vsyncpa [#allocation3], 1
    %s439 = scalar_lea.sflag [#allocation3], 1
    %440 = vsyncpa %s439, 1
    %441 = vsyncpa [#allocation6], 1
    %442 = vsyncpa [#allocation4], 1
    %s443 = scalar_lea.sflag [#allocation4], 1
    %444 = vsyncpa %s443, 1

</llo_original>
